<compile_context>
chip_gen: v5e
topology: v5e:2x2
jax: 0.10.0
libtpu: 0.0.40
codegen_flags: <defaults>
</compile_context>

<pallas_src>
import functools
import math

import jax
import jax.numpy as jnp
from jax.experimental import pallas as pl
from jax.experimental.pallas import tpu as pltpu

LANE = 128                      # vreg lane width
SUBLANE = 8                     # f32 sublane tile
TARGET_BLOCK_BYTES = 2 << 20    # ~2 MiB f32 per block buffer


def _cdiv(a, b):
    return -(-a // b)


def _quant_kernel(c_ref, a_ref, bc_ref, x_ref, o_ref, *, m1, bf16_tanh):
    """One (block_rows, cols) tile: acc = sum_k a_k * tanh(x*c + c*b_k)."""
    c = c_ref[0]                                     # SMEM scalar (runtime c)
    xc = x_ref[...].astype(jnp.float32) * c          # single VPU mul per elem
    if m1 == 0:
        o_ref[...] = jnp.zeros_like(xc).astype(o_ref.dtype)
        return
    acc = None
    for k in range(m1):                              # tiny static unrolled loop
        arg = xc + bc_ref[k]
        if bf16_tanh:
            # EUP-bound fast path (v6e/v7x): bf16 tanh, f32 accumulate.
            t = jnp.tanh(arg.astype(jnp.bfloat16)).astype(jnp.float32)
        else:
            t = jnp.tanh(arg)
        term = a_ref[k] * t
        acc = term if acc is None else acc + term
    o_ref[...] = acc.astype(o_ref.dtype)


def _choose_layout(n):
    """Pick a lane-dense 2-D view (cols % 128 == 0); pad only as a last resort."""
    # Prefer enough rows for full sublane occupancy.
    for cols in (4096, 2048, 1024, 512, 256, 128):
        if n % cols == 0 and (n // cols) >= SUBLANE:
            return n // cols, cols, 0
    # Any exact lane-multiple factorization (few rows).
    for cols in (4096, 2048, 1024, 512, 256, 128):
        if n % cols == 0:
            return n // cols, cols, 0
    # Ragged fallback: pad to a multiple of 512 lanes (pad <= 511 elements).
    cols = 512
    pad = (-n) % cols
    return (n + pad) // cols, cols, pad


def _choose_block_rows(rows, cols):
    """~2 MiB blocks, >=2 blocks when splittable (v7x megacore), no divisor cliff."""
    if rows <= SUBLANE:
        return rows                                  # single full-dim block
    target = max(SUBLANE,
                 (TARGET_BLOCK_BYTES // (cols * 4)) // SUBLANE * SUBLANE)
    n_blocks = max(2, _cdiv(rows, target))           # >=2 for two TensorCores
    block_rows = _cdiv(_cdiv(rows, n_blocks), SUBLANE) * SUBLANE
    return max(SUBLANE, min(block_rows, target))


def quantization_layer_forward(x, weight, c, *, bf16_tanh=False):
    """Pallas implementation of QuantizationLayer.forward.

    x:      any-shape float array (NCHW in the tests)
    weight: (codebookSize - 1, 2) float, column 0 = amplitude, column 1 = offset
    c:      hardness constant `ci` (python float or jnp scalar; runtime input)
    bf16_tanh: run tanh in bf16 (v6e/v7x EUP fast path; ~1e-3 rel. error)
    """
    orig_shape = x.shape
    orig_dtype = x.dtype

    n = int(x.size)
    rows, cols, pad = _choose_layout(n)

    if pad:
        flat = jnp.pad(x.reshape(-1), (0, pad))
        x2d = flat.reshape(rows, cols)
    else:
        x2d = x.reshape(rows, cols)          # contiguous reshape: no HBM copy

    c_arr = jnp.asarray(c, dtype=jnp.float32).reshape((1,))
    a = weight[:, 0].astype(jnp.float32)               # amplitudes   (m-1,)
    bc = weight[:, 1].astype(jnp.float32) * c_arr[0]   # c * offsets  (m-1,)
    m1 = int(weight.shape[0])

    block_rows = _choose_block_rows(rows, cols)
    grid = (_cdiv(rows, block_rows),)                  # partial tail block OK
    kernel = functools.partial(_quant_kernel, m1=m1, bf16_tanh=bf16_tanh)

    out2d = pl.pallas_call(
        kernel,
        out_shape=jax.ShapeDtypeStruct((rows, cols), orig_dtype),
        grid=grid,
        in_specs=[
            # runtime scalar c + tiny codebook vectors: whole arrays in SMEM
            pl.BlockSpec(memory_space=pltpu.MemorySpace.SMEM),
            pl.BlockSpec(memory_space=pltpu.MemorySpace.SMEM),
            pl.BlockSpec(memory_space=pltpu.MemorySpace.SMEM),
            # large lane-dense elementwise tile of x
            pl.BlockSpec((block_rows, cols), lambda i: (i, 0)),
        ],
        out_specs=pl.BlockSpec((block_rows, cols), lambda i: (i, 0)),
        compiler_params=pltpu.CompilerParams(
            dimension_semantics=("parallel",)),
        cost_estimate=pl.CostEstimate(
            flops=4 * m1 * n,
            transcendentals=m1 * n,
            bytes_accessed=8 * n),
    )(c_arr, a, bc, x2d)

    if pad:
        return out2d.reshape(-1)[:n].reshape(orig_shape)
    return out2d.reshape(orig_shape)


def _reference(x, weight, c):
    """Pure-JAX reference mirroring the PyTorch loop."""
    ret = jnp.zeros_like(x)
    for k in range(weight.shape[0]):
        ret = ret + weight[k, 0] * jnp.tanh((x + weight[k, 1]) * c)
    return ret


if __name__ == "__main__":
    # Module hyper-parameters (in_features / out_features are unused in forward).
    in_features, out_features = 16, 16
    codebook_size = 8      # m
    ci = 10.0              # hardness constant c

    key = jax.random.PRNGKey(0)
    k_w, k_x = jax.random.split(key)

    # reset_parameters(): uniform(-std, std), std = 1/sqrt(numel) = 1/sqrt((m-1)*2)
    std = 1.0 / math.sqrt((codebook_size - 1) * 2)
    weight = jax.random.uniform(
        k_w, (codebook_size - 1, 2), minval=-std, maxval=std, dtype=jnp.float32)

    # NCHW input, small shapes
    x = jax.random.normal(k_x, (2, 4, 16, 16), dtype=jnp.float32)

    out = quantization_layer_forward(x, weight, ci)
    out = jax.block_until_ready(out)

    ref = _reference(x, weight, ci)
    assert out.shape == x.shape and out.dtype == x.dtype
    assert jnp.allclose(out, ref, atol=1e-5, rtol=1e-5), "mismatch vs reference"

    print("KERNEL_OK")
</pallas_src>

<mosaic_0001>
module attributes {stable_mosaic.version = 11 : i64} {
  func.func @_quant_kernel(%arg0: i32, %arg1: memref<1xf32, #tpu.memory_space<smem>>, %arg2: memref<7xf32, #tpu.memory_space<smem>>, %arg3: memref<7xf32, #tpu.memory_space<smem>>, %arg4: memref<8x256xf32, #tpu.memory_space<vmem>>, %arg5: memref<8x256xf32, #tpu.memory_space<vmem>>) attributes {dimension_semantics = [#tpu.dimension_semantics<parallel>], iteration_bounds = array<i64: 1>, scalar_prefetch = 0 : i64, scratch_operands = 0 : i64, tpu.core_type = #tpu.core_type<tc>, window_params = [{transform_indices = @transform_0, window_bounds = array<i64: 1>}, {transform_indices = @transform_1, window_bounds = array<i64: 7>}, {transform_indices = @transform_2, window_bounds = array<i64: 7>}, {transform_indices = @transform_3, window_bounds = array<i64: 8, 256>}, {transform_indices = @transform_4, window_bounds = array<i64: 8, 256>}]} {
    %c0 = arith.constant 0 : index
    %0 = memref.load %arg1[%c0] : memref<1xf32, #tpu.memory_space<smem>>
    %c0_0 = arith.constant 0 : index
    %c0_1 = arith.constant 0 : index
    %1 = vector.load %arg4[%c0_0, %c0_1] : memref<8x256xf32, #tpu.memory_space<vmem>>, vector<8x256xf32>
    %2 = vector.broadcast %0 : f32 to vector<8x256xf32>
    %3 = arith.mulf %1, %2 : vector<8x256xf32>
    %c0_2 = arith.constant 0 : index
    %4 = memref.load %arg3[%c0_2] : memref<7xf32, #tpu.memory_space<smem>>
    %5 = vector.broadcast %4 : f32 to vector<8x256xf32>
    %6 = arith.addf %3, %5 : vector<8x256xf32>
    %7 = math.tanh %6 : vector<8x256xf32>
    %c0_3 = arith.constant 0 : index
    %8 = memref.load %arg2[%c0_3] : memref<7xf32, #tpu.memory_space<smem>>
    %9 = vector.broadcast %8 : f32 to vector<8x256xf32>
    %10 = arith.mulf %9, %7 : vector<8x256xf32>
    %c1 = arith.constant 1 : index
    %11 = memref.load %arg3[%c1] : memref<7xf32, #tpu.memory_space<smem>>
    %12 = vector.broadcast %11 : f32 to vector<8x256xf32>
    %13 = arith.addf %3, %12 : vector<8x256xf32>
    %14 = math.tanh %13 : vector<8x256xf32>
    %c1_4 = arith.constant 1 : index
    %15 = memref.load %arg2[%c1_4] : memref<7xf32, #tpu.memory_space<smem>>
    %16 = vector.broadcast %15 : f32 to vector<8x256xf32>
    %17 = arith.mulf %16, %14 : vector<8x256xf32>
    %18 = arith.addf %10, %17 : vector<8x256xf32>
    %c2 = arith.constant 2 : index
    %19 = memref.load %arg3[%c2] : memref<7xf32, #tpu.memory_space<smem>>
    %20 = vector.broadcast %19 : f32 to vector<8x256xf32>
    %21 = arith.addf %3, %20 : vector<8x256xf32>
    %22 = math.tanh %21 : vector<8x256xf32>
    %c2_5 = arith.constant 2 : index
    %23 = memref.load %arg2[%c2_5] : memref<7xf32, #tpu.memory_space<smem>>
    %24 = vector.broadcast %23 : f32 to vector<8x256xf32>
    %25 = arith.mulf %24, %22 : vector<8x256xf32>
    %26 = arith.addf %18, %25 : vector<8x256xf32>
    %c3 = arith.constant 3 : index
    %27 = memref.load %arg3[%c3] : memref<7xf32, #tpu.memory_space<smem>>
    %28 = vector.broadcast %27 : f32 to vector<8x256xf32>
    %29 = arith.addf %3, %28 : vector<8x256xf32>
    %30 = math.tanh %29 : vector<8x256xf32>
    %c3_6 = arith.constant 3 : index
    %31 = memref.load %arg2[%c3_6] : memref<7xf32, #tpu.memory_space<smem>>
    %32 = vector.broadcast %31 : f32 to vector<8x256xf32>
    %33 = arith.mulf %32, %30 : vector<8x256xf32>
    %34 = arith.addf %26, %33 : vector<8x256xf32>
    %c4 = arith.constant 4 : index
    %35 = memref.load %arg3[%c4] : memref<7xf32, #tpu.memory_space<smem>>
    %36 = vector.broadcast %35 : f32 to vector<8x256xf32>
    %37 = arith.addf %3, %36 : vector<8x256xf32>
    %38 = math.tanh %37 : vector<8x256xf32>
    %c4_7 = arith.constant 4 : index
    %39 = memref.load %arg2[%c4_7] : memref<7xf32, #tpu.memory_space<smem>>
    %40 = vector.broadcast %39 : f32 to vector<8x256xf32>
    %41 = arith.mulf %40, %38 : vector<8x256xf32>
    %42 = arith.addf %34, %41 : vector<8x256xf32>
    %c5 = arith.constant 5 : index
    %43 = memref.load %arg3[%c5] : memref<7xf32, #tpu.memory_space<smem>>
    %44 = vector.broadcast %43 : f32 to vector<8x256xf32>
    %45 = arith.addf %3, %44 : vector<8x256xf32>
    %46 = math.tanh %45 : vector<8x256xf32>
    %c5_8 = arith.constant 5 : index
    %47 = memref.load %arg2[%c5_8] : memref<7xf32, #tpu.memory_space<smem>>
    %48 = vector.broadcast %47 : f32 to vector<8x256xf32>
    %49 = arith.mulf %48, %46 : vector<8x256xf32>
    %50 = arith.addf %42, %49 : vector<8x256xf32>
    %c6 = arith.constant 6 : index
    %51 = memref.load %arg3[%c6] : memref<7xf32, #tpu.memory_space<smem>>
    %52 = vector.broadcast %51 : f32 to vector<8x256xf32>
    %53 = arith.addf %3, %52 : vector<8x256xf32>
    %54 = math.tanh %53 : vector<8x256xf32>
    %c6_9 = arith.constant 6 : index
    %55 = memref.load %arg2[%c6_9] : memref<7xf32, #tpu.memory_space<smem>>
    %56 = vector.broadcast %55 : f32 to vector<8x256xf32>
    %57 = arith.mulf %56, %54 : vector<8x256xf32>
    %58 = arith.addf %50, %57 : vector<8x256xf32>
    %c0_10 = arith.constant 0 : index
    %c0_11 = arith.constant 0 : index
    %59 = vector.load %arg5[%c0_10, %c0_11] : memref<8x256xf32, #tpu.memory_space<vmem>>, vector<8x256xf32>
    tpu.vector_store %arg5[%c0_10, %c0_11], %58 {strides = array<i32>} : memref<8x256xf32, #tpu.memory_space<vmem>>, vector<8x256xf32>,
    return
  }
  func.func @transform_0(%arg0: i32) -> i32 {
    %c0_i32 = arith.constant 0 : i32
    %c0_i32_0 = arith.constant 0 : i32
    return %c0_i32 : i32
  }
  func.func @transform_1(%arg0: i32) -> i32 {
    %c0_i32 = arith.constant 0 : i32
    %c0_i32_0 = arith.constant 0 : i32
    return %c0_i32 : i32
  }
  func.func @transform_2(%arg0: i32) -> i32 {
    %c0_i32 = arith.constant 0 : i32
    %c0_i32_0 = arith.constant 0 : i32
    return %c0_i32 : i32
  }
  func.func @transform_3(%arg0: i32) -> (i32, i32) {
    %c0_i32 = arith.constant 0 : i32
    %c0_i32_0 = arith.constant 0 : i32
    return %arg0, %c0_i32 : i32, i32
  }
  func.func @transform_4(%arg0: i32) -> (i32, i32) {
    %c0_i32 = arith.constant 0 : i32
    %c0_i32_0 = arith.constant 0 : i32
    return %arg0, %c0_i32 : i32, i32
  }
}

</mosaic_0001>

<llo_original>
// kernel: tpu_custom_call.1
$region0: #{tpu_custom_call.1}
  #allocation0 [shape = 'u32[]', space=smem, size = 0x4, offset = 0x4, fixed_abs, tag = 'smem constant byte address 0x4 - core index']
  #allocation1 [shape = 'u32[72,128]{1,0:T(1,128)}', space=vmem, size = 0x9000, scoped, tag = 'internal scratch']
  #allocation2 [shape = 'f32[1]{0:T(128)S(6)}', space=smem, size = 0x200, scoped, tag = 'scoped memory for tpu_custom_call.1']
  %s0 = inlined_call_operand.<no memory space> [shape: f32[1], index: 0, kind: input, shape index: {}]
  %s1 = inlined_call_operand.vmem [shape: f32[7], index: 1, kind: input, shape index: {}]
  %s2 = inlined_call_operand.vmem [shape: f32[7], index: 2, kind: input, shape index: {}]
  %s3 = inlined_call_operand.hbm [shape: f32[8,256], index: 3, kind: input, shape index: {}]
  %s4 = inlined_call_operand.hbm [shape: f32[8,256], index: 4, kind: output, shape index: {}]
  %s5 = sld [smem:[#allocation0]]
  $region38: #{tpu_custom_call.1} parent=0
    _
  %s7 = ssub.s32 1, %s5
  %s8 = scalar_select 0, %s7, %s5
  %9 = sst [smem:[#allocation2]] %s0
  $region1: #{tpu_custom_call.1} parent=0
    #allocation3 [shape = 'u8[512]{0}', space=smem, size = 0x200, scoped, tag = 'input window, operand 1, single buffered']
    #allocation4 [shape = 's32[1]{0}', space=sflag, size = 0x4, scoped, tag = 'scoped memory for tpu_custom_call.1']
    #allocation5 [shape = 's32[1]{0}', space=sflag, size = 0x4, scoped, tag = 'scoped memory for tpu_custom_call.1']
    #allocation6 [shape = 's32[1]{0}', space=sflag, size = 0x4, scoped, tag = 'scoped memory for tpu_custom_call.1']
    #allocation7 [shape = 'u8[512]{0}', space=smem, size = 0x200, scoped, tag = 'input window, operand 2, single buffered']
    #allocation8 [shape = 's32[1]{0}', space=sflag, size = 0x4, scoped, tag = 'scoped memory for tpu_custom_call.1']
    #allocation9 [shape = 'u8[8192]{0}', space=vmem, size = 0x2000, scoped, tag = 'input window, operand 3, single buffered']
    #allocation10 [shape = 'u8[8192]{0}', space=vmem, size = 0x2000, scoped, tag = 'output window, operand 0, single buffered']
    %10 = vsyncpa [#allocation6], 0
    %11 = vsyncpa [#allocation8], 0
    %12 = vsyncpa [#allocation4], 0
    %13 = vsyncpa [#allocation5], 0
    // Predicated region
    $region2: #{tpu_custom_call.1} parent=1 // pred_check
      _
    $region3: #{tpu_custom_call.1} parent=1 // pred_check_branch
      %15 = sbr.rel (0) target = $region5
    $region4: #{tpu_custom_call.1} parent=1 // pred_region
      _
    $region5: #{tpu_custom_call.1} parent=1 // pred_fallthru
      _
    // Predicated region
    $region6: #{tpu_custom_call.1} parent=1 // pred_check
      _
    $region7: #{tpu_custom_call.1} parent=1 // pred_check_branch
      %17 = sbr.rel (0) target = $region9
    $region8: #{tpu_custom_call.1} parent=1 // pred_region
      %19 = vsyncadd [#allocation6], 0
      %s21 = sshll.u32 %s1, 4
      %s22 = int_to_ptr.vmem [resolvable:$true] %s21
      %24 = dma.vmem_to_smem %s22, 16, [#allocation3], [#allocation6]
    $region9: #{tpu_custom_call.1} parent=1 // pred_fallthru
      _
    // Predicated region
    $region10: #{tpu_custom_call.1} parent=1 // pred_check
      _
    $region11: #{tpu_custom_call.1} parent=1 // pred_check_branch
      %26 = sbr.rel (0) target = $region13
    $region12: #{tpu_custom_call.1} parent=1 // pred_region
      %28 = vsyncadd [#allocation8], 0
      %s30 = sshll.u32 %s2, 4
      %s31 = int_to_ptr.vmem [resolvable:$true] %s30
      %33 = dma.vmem_to_smem %s31, 16, [#allocation7], [#allocation8]
    $region13: #{tpu_custom_call.1} parent=1 // pred_fallthru
      _
    // Predicated region
    $region14: #{tpu_custom_call.1} parent=1 // pred_check
      _
    $region15: #{tpu_custom_call.1} parent=1 // pred_check_branch
      %35 = sbr.rel (0) target = $region17
    $region16: #{tpu_custom_call.1} parent=1 // pred_region
      %37 = vsyncadd [#allocation4], 0
      %s39 = sshll.u32 %s3, 4
      %s40 = int_to_ptr.hbm [resolvable:$true] %s39
      %s41 = sshll.u32 [#allocation9], 4
      %s42 = int_to_ptr.vmem [resolvable:$true] %s41
      %44 = dma.hbm_to_vmem [thread:$0]  %s40, 256, %s42, [#allocation4]
    $region17: #{tpu_custom_call.1} parent=1 // pred_fallthru
      _
    // Predicated region
    $region18: #{tpu_custom_call.1} parent=1 // pred_check
      _
    $region19: #{tpu_custom_call.1} parent=1 // pred_check_branch
      %46 = sbr.rel (0) target = $region21
    $region20: #{tpu_custom_call.1} parent=1 // pred_region
      %48 = dma.done [#allocation6], 16
    $region21: #{tpu_custom_call.1} parent=1 // pred_fallthru
      _
    // Predicated region
    $region22: #{tpu_custom_call.1} parent=1 // pred_check
      _
    $region23: #{tpu_custom_call.1} parent=1 // pred_check_branch
      %50 = sbr.rel (0) target = $region25
    $region24: #{tpu_custom_call.1} parent=1 // pred_region
      %52 = dma.done [#allocation8], 16
    $region25: #{tpu_custom_call.1} parent=1 // pred_fallthru
      _
    // Predicated region
    $region26: #{tpu_custom_call.1} parent=1 // pred_check
      _
    $region27: #{tpu_custom_call.1} parent=1 // pred_check_branch
      %54 = sbr.rel (0) target = $region29
    $region28: #{tpu_custom_call.1} parent=1 // pred_region
      %56 = dma.done [#allocation4], 256
    $region29: #{tpu_custom_call.1} parent=1 // pred_fallthru
      _
    %57 = sfence
    %s58 = sld [smem:[#allocation2]]
    %v59 = vld [vmem:[#allocation9] sm:$0xff]
    %v60 = vld [vmem:[#allocation9 + $0x8] sm:$0xff]
    %v61 = vstv %s58
    %v62 = vmul.f32 %v59, %v61
    %v63 = vmul.f32 %v60, %v61
    %s64 = sld [smem:[#allocation7]]
    %v65 = vstv %s64
    %v66 = vadd.f32 %v62, %v65
    %v67 = vadd.f32 %v63, %v65
    %v68 = vtanh.pop %v66
    %v69 = vtanh.pop %v67
    %s70 = sld [smem:[#allocation3]]
    %v71 = vstv %s70
    %v72 = vmul.f32 %v71, %v68
    %v73 = vmul.f32 %v71, %v69
    %s74 = sld [smem:[#allocation7 + $0x1]]
    %v75 = vstv %s74
    %v76 = vadd.f32 %v62, %v75
    %v77 = vadd.f32 %v63, %v75
    %v78 = vtanh.pop %v76
    %v79 = vtanh.pop %v77
    %s80 = sld [smem:[#allocation3 + $0x1]]
    %v81 = vstv %s80
    %v82 = vmul.f32 %v81, %v78
    %v83 = vmul.f32 %v81, %v79
    %v84 = vadd.f32 %v72, %v82
    %v85 = vadd.f32 %v73, %v83
    %s86 = sld [smem:[#allocation7 + $0x2]]
    %v87 = vstv %s86
    %v88 = vadd.f32 %v62, %v87
    %v89 = vadd.f32 %v63, %v87
    %v90 = vtanh.pop %v88
    %v91 = vtanh.pop %v89
    %s92 = sld [smem:[#allocation3 + $0x2]]
    %v93 = vstv %s92
    %v94 = vmul.f32 %v93, %v90
    %v95 = vmul.f32 %v93, %v91
    %v96 = vadd.f32 %v84, %v94
    %v97 = vadd.f32 %v85, %v95
    %s98 = sld [smem:[#allocation7 + $0x3]]
    %v99 = vstv %s98
    %v100 = vadd.f32 %v62, %v99
    %v101 = vadd.f32 %v63, %v99
    %v102 = vtanh.pop %v100
    %v103 = vtanh.pop %v101
    %s104 = sld [smem:[#allocation3 + $0x3]]
    %v105 = vstv %s104
    %v106 = vmul.f32 %v105, %v102
    %v107 = vmul.f32 %v105, %v103
    %v108 = vadd.f32 %v96, %v106
    %v109 = vadd.f32 %v97, %v107
    %s110 = sld [smem:[#allocation7 + $0x4]]
    %v111 = vstv %s110
    %v112 = vadd.f32 %v62, %v111
    %v113 = vadd.f32 %v63, %v111
    %v114 = vtanh.pop %v112
    %v115 = vtanh.pop %v113
    %s116 = sld [smem:[#allocation3 + $0x4]]
    %v117 = vstv %s116
    %v118 = vmul.f32 %v117, %v114
    %v119 = vmul.f32 %v117, %v115
    %v120 = vadd.f32 %v108, %v118
    %v121 = vadd.f32 %v109, %v119
    %s122 = sld [smem:[#allocation7 + $0x5]]
    %v123 = vstv %s122
    %v124 = vadd.f32 %v62, %v123
    %v125 = vadd.f32 %v63, %v123
    %v126 = vtanh.pop %v124
    %v127 = vtanh.pop %v125
    %s128 = sld [smem:[#allocation3 + $0x5]]
    %v129 = vstv %s128
    %v130 = vmul.f32 %v129, %v126
    %v131 = vmul.f32 %v129, %v127
    %v132 = vadd.f32 %v120, %v130
    %v133 = vadd.f32 %v121, %v131
    %s134 = sld [smem:[#allocation7 + $0x6]]
    %v135 = vstv %s134
    %v136 = vadd.f32 %v62, %v135
    %v137 = vadd.f32 %v63, %v135
    %v138 = vtanh.pop %v136
    %v139 = vtanh.pop %v137
    %s140 = sld [smem:[#allocation3 + $0x6]]
    %v141 = vstv %s140
    %v142 = vmul.f32 %v141, %v138
    %v143 = vmul.f32 %v141, %v139
    %v144 = vadd.f32 %v132, %v142
    %v145 = vadd.f32 %v133, %v143
    %146 = vst [vmem:[#allocation10] sm:$0xff] %v144
    %147 = vst [vmem:[#allocation10 + $0x8] sm:$0xff] %v145
    // Predicated region
    $region30: #{tpu_custom_call.1} parent=1 // pred_check
      _
    $region31: #{tpu_custom_call.1} parent=1 // pred_check_branch
      %149 = sbr.rel (0) target = $region33
    $region32: #{tpu_custom_call.1} parent=1 // pred_region
      %151 = vsyncadd [#allocation5], 0
      %s153 = sshll.u32 [#allocation10], 4
      %s154 = int_to_ptr.vmem [resolvable:$true] %s153
      %s155 = sshll.u32 %s4, 4
      %s156 = int_to_ptr.hbm [resolvable:$true] %s155
      %158 = dma.vmem_to_hbm [thread:$0]  %s154, 256, %s156, [#allocation5]
    $region33: #{tpu_custom_call.1} parent=1 // pred_fallthru
      _
    // Predicated region
    $region34: #{tpu_custom_call.1} parent=1 // pred_check
      _
    $region35: #{tpu_custom_call.1} parent=1 // pred_check_branch
      %160 = sbr.rel (0) target = $region37
    $region36: #{tpu_custom_call.1} parent=1 // pred_region
      %162 = dma.done [#allocation5], 256
    $region37: #{tpu_custom_call.1} parent=1 // pred_fallthru
      _
    %163 = vsyncpa [#allocation4], 1
    %164 = vsyncpa [#allocation5], 1
    %165 = vsyncpa [#allocation6], 1
    %166 = vsyncpa [#allocation8], 1

</llo_original>
